<compile_context>
chip_gen: v6e
topology: v6e:2x2x1
jax: 0.10.0
libtpu: 0.0.40
codegen_flags: <defaults>
</compile_context>

<pallas_src>
import math

import jax
import jax.numpy as jnp
from jax.experimental import pallas as pl
from jax.experimental.pallas import tpu as pltpu

_LANES = 128
_SUBLANES = 8


def _score_den_kernel(x_ref, a_ref, b_ref, out_ref):
    """Accumulate sum over a (tile_rows, Dfold) tile of (a*x + b)*x.

    out_ref is a (1, 8, Dfold) f32 block whose block index is constant along
    the inner ("arbitrary") grid axis, so it stays resident in VMEM and acts
    as a vector accumulator for this core.
    """
    i = pl.program_id(1)

    @pl.when(i == 0)
    def _():
        out_ref[...] = jnp.zeros_like(out_ref)

    x = x_ref[...].astype(jnp.float32)          # (TR, Dfold)
    a = a_ref[...]                              # (1, Dfold) -> broadcasts
    b = b_ref[...]                              # (1, Dfold)

    elem = (a * x + b) * x                      # a*x^2 + b*x   (2 VALU ops/elem)
    # Partial reduce with VPU adds only: regroup whole (8, lanes) vregs and
    # sum over the leading (non-vreg) axis.
    partial = elem.reshape(-1, _SUBLANES, elem.shape[-1]).sum(axis=0)
    out_ref[...] = out_ref[...] + partial[None]


def _pick_tile_rows(rows, target_rows):
    """Largest multiple-of-8 divisor of `rows` that is <= target_rows."""
    if rows <= target_rows:
        return rows
    t = target_rows - (target_rows % _SUBLANES)
    while t >= _SUBLANES:
        if rows % t == 0:
            return t
        t -= _SUBLANES
    return rows


def score_den_loss(x, mu, log_std, reduction="mean", target_rows=4096):
    """Pallas forward of ScoreDenLoss.

    x:       (N, D) samples drawn from the model q (f32 or bf16).
    mu:      (1, D) model mean (f32).
    log_std: (1, D) model log std (f32).
    """
    N, D = x.shape
    if reduction not in ("mean", "sum"):
        # TODO(synk): reduction=None (per-sample output) not implemented.
        raise NotImplementedError(f"reduction={reduction!r}")

    mu = mu.astype(jnp.float32)
    log_std = log_std.astype(jnp.float32)

    # Per-lane quadratic coefficients (exp done once, outside the kernel):
    #   elem(x) = a*x^2 + b*x + c  ==  -0.5*((x-mu)/std)^2 - log_std + 0.5*x^2
    inv_var = jnp.exp(-2.0 * log_std)
    a = 0.5 * (1.0 - inv_var)                   # (1, D)
    b = mu * inv_var                            # (1, D)
    c = -0.5 * mu * mu * inv_var - log_std      # (1, D) constant-in-x term

    # ---- lane-dense folding of D into the 128-lane axis -------------------
    if D % _LANES == 0:
        fold = 1
    elif _LANES % D == 0 and N % (_LANES // D) == 0:
        fold = _LANES // D
    else:
        fold = 1                                # falls back to full-D blocks
    Dfold = fold * D
    rows = N // fold

    x_folded = x.reshape(rows, Dfold)
    a_t = jnp.tile(a, (1, fold))                # (1, Dfold)
    b_t = jnp.tile(b, (1, fold))                # (1, Dfold)

    # ---- tiling ------------------------------------------------------------
    tile_rows = _pick_tile_rows(rows, target_rows)
    assert rows % tile_rows == 0, "tile_rows must divide folded row count"
    assert tile_rows % _SUBLANES == 0, (
        "folded sample count must give tiles that are a multiple of 8 rows")
    n_tiles = rows // tile_rows

    # Split the tile loop across 2 cores when possible (helps v7x; a size-2
    # parallel axis is just a loop on single-TC chips).
    n_split = 2 if (n_tiles >= 2 and n_tiles % 2 == 0) else 1
    steps = n_tiles // n_split

    partials = pl.pallas_call(
        _score_den_kernel,
        out_shape=jax.ShapeDtypeStruct((n_split, _SUBLANES, Dfold), jnp.float32),
        grid_spec=pltpu.PrefetchScalarGridSpec(
            num_scalar_prefetch=0,
            grid=(n_split, steps),
            in_specs=[
                pl.BlockSpec((tile_rows, Dfold),
                             lambda cc, ii: (cc * steps + ii, 0)),  # sample tile
                pl.BlockSpec((1, Dfold), lambda cc, ii: (0, 0)),    # a (resident)
                pl.BlockSpec((1, Dfold), lambda cc, ii: (0, 0)),    # b (resident)
            ],
            out_specs=pl.BlockSpec((1, _SUBLANES, Dfold),
                                   lambda cc, ii: (cc, 0, 0)),      # per-core acc
        ),
        compiler_params=pltpu.CompilerParams(
            dimension_semantics=("parallel", "arbitrary"),
        ),
    )(x_folded, a_t, b_t)

    # Tiny final collapse + constant term + reduction scaling (plain JAX).
    total = jnp.sum(partials) + jnp.float32(N) * jnp.sum(c)
    if reduction == "mean":
        total = total / jnp.float32(N)
    return total


def reference_loss(x, mu, log_std, reduction="mean"):
    """Pure-JAX reference of the same forward."""
    std = jnp.exp(log_std)
    log_q = jnp.sum(
        -0.5 * ((x - mu) / std) ** 2 - log_std - 0.5 * math.log(2.0 * math.pi),
        axis=-1,
    )
    log_p = jnp.sum(-0.5 * x * x - 0.5 * math.log(2.0 * math.pi), axis=-1)
    f = log_q - log_p
    if reduction == "mean":
        return jnp.mean(f)
    return jnp.sum(f)


if __name__ == "__main__":
    num_samples = 128   # num_samples argument of ScoreDenLoss.forward
    dim = 32            # event dimensionality of the model / log_p

    # Deterministic "model" parameters (diagonal Gaussian q_theta).
    mu = (0.05 * jnp.arange(dim, dtype=jnp.float32)).reshape(1, dim)
    log_std = (-0.1 + 0.01 * jnp.arange(dim, dtype=jnp.float32)).reshape(1, dim)

    # Draw samples from q via reparameterization (glue, outside the kernel).
    key = jax.random.PRNGKey(0)
    eps = jax.random.normal(key, (num_samples, dim), dtype=jnp.float32)
    x = mu + jnp.exp(log_std) * eps

    loss = score_den_loss(x, mu, log_std, reduction="mean")
    loss = jax.block_until_ready(loss)

    ref = reference_loss(x, mu, log_std, reduction="mean")
    assert jnp.allclose(loss, ref, rtol=1e-5, atol=1e-5), (loss, ref)

    # Also sanity-check reduction='sum'.
    loss_sum = jax.block_until_ready(score_den_loss(x, mu, log_std, reduction="sum"))
    ref_sum = reference_loss(x, mu, log_std, reduction="sum")
    assert jnp.allclose(loss_sum, ref_sum, rtol=1e-5, atol=1e-4), (loss_sum, ref_sum)

    print("KERNEL_OK")
</pallas_src>

<mosaic_0001>
module attributes {stable_mosaic.version = 11 : i64} {
  func.func @_score_den_kernel(%arg0: i32, %arg1: i32, %arg2: memref<32x128xf32, #tpu.memory_space<vmem>>, %arg3: memref<1x128xf32, #tpu.memory_space<vmem>>, %arg4: memref<1x128xf32, #tpu.memory_space<vmem>>, %arg5: memref<1x8x128xf32, #tpu.memory_space<vmem>>) attributes {dimension_semantics = [#tpu.dimension_semantics<parallel>, #tpu.dimension_semantics<arbitrary>], iteration_bounds = array<i64: 1, 1>, scalar_prefetch = 0 : i64, scratch_operands = 0 : i64, tpu.core_type = #tpu.core_type<tc>, window_params = [{transform_indices = @transform_0, window_bounds = array<i64: 32, 128>}, {pipeline_mode = #tpu.pipeline_mode<synchronous>, transform_indices = @transform_1, window_bounds = array<i64: 1, 128>}, {pipeline_mode = #tpu.pipeline_mode<synchronous>, transform_indices = @transform_2, window_bounds = array<i64: 1, 128>}, {transform_indices = @transform_3, window_bounds = array<i64: 1, 8, 128>}]} {
    %c0_i32 = arith.constant 0 : i32
    %0 = arith.cmpi eq, %arg1, %c0_i32 : i32
    %1 = arith.extui %0 : i1 to i32
    %c0_i32_0 = arith.constant 0 : i32
    %2 = arith.cmpi ne, %1, %c0_i32_0 : i32
    scf.if %2 {
      %cst_12 = arith.constant 0.000000e+00 : f32
      %17 = vector.broadcast %cst_12 : f32 to vector<1x8x128xf32>
      %c0_13 = arith.constant 0 : index
      %c0_14 = arith.constant 0 : index
      %c0_15 = arith.constant 0 : index
      %18 = vector.load %arg5[%c0_13, %c0_14, %c0_15] : memref<1x8x128xf32, #tpu.memory_space<vmem>>, vector<1x8x128xf32>
      tpu.vector_store %arg5[%c0_13, %c0_14, %c0_15], %17 {strides = array<i32>} : memref<1x8x128xf32, #tpu.memory_space<vmem>>, vector<1x8x128xf32>,
    } else {
    }
    %c0 = arith.constant 0 : index
    %c0_1 = arith.constant 0 : index
    %3 = vector.load %arg2[%c0, %c0_1] : memref<32x128xf32, #tpu.memory_space<vmem>>, vector<32x128xf32>
    %c0_2 = arith.constant 0 : index
    %c0_3 = arith.constant 0 : index
    %4 = vector.load %arg3[%c0_2, %c0_3] : memref<1x128xf32, #tpu.memory_space<vmem>>, vector<1x128xf32>
    %c0_4 = arith.constant 0 : index
    %c0_5 = arith.constant 0 : index
    %5 = vector.load %arg4[%c0_4, %c0_5] : memref<1x128xf32, #tpu.memory_space<vmem>>, vector<1x128xf32>
    %6 = vector.broadcast %4 : vector<1x128xf32> to vector<32x128xf32>
    %7 = arith.mulf %6, %3 : vector<32x128xf32>
    %8 = vector.broadcast %5 : vector<1x128xf32> to vector<32x128xf32>
    %9 = arith.addf %7, %8 : vector<32x128xf32>
    %10 = arith.mulf %9, %3 : vector<32x128xf32>
    %11 = vector.shape_cast %10 : vector<32x128xf32> to vector<4x8x128xf32>
    %cst = arith.constant dense<0.000000e+00> : vector<8x128xf32>
    %12 = vector.multi_reduction <add>, %11, %cst [0] : vector<4x8x128xf32> to vector<8x128xf32>
    %c0_6 = arith.constant 0 : index
    %c0_7 = arith.constant 0 : index
    %c0_8 = arith.constant 0 : index
    %13 = vector.load %arg5[%c0_6, %c0_7, %c0_8] : memref<1x8x128xf32, #tpu.memory_space<vmem>>, vector<1x8x128xf32>
    %14 = vector.shape_cast %12 : vector<8x128xf32> to vector<1x8x128xf32>
    %15 = arith.addf %13, %14 : vector<1x8x128xf32>
    %c0_9 = arith.constant 0 : index
    %c0_10 = arith.constant 0 : index
    %c0_11 = arith.constant 0 : index
    %16 = vector.load %arg5[%c0_9, %c0_10, %c0_11] : memref<1x8x128xf32, #tpu.memory_space<vmem>>, vector<1x8x128xf32>
    tpu.vector_store %arg5[%c0_9, %c0_10, %c0_11], %15 {strides = array<i32>} : memref<1x8x128xf32, #tpu.memory_space<vmem>>, vector<1x8x128xf32>,
    return
  }
  func.func @transform_0(%arg0: i32, %arg1: i32) -> (i32, i32) {
    %c1_i32 = arith.constant 1 : i32
    %0 = arith.muli %arg0, %c1_i32 : i32
    %1 = arith.addi %0, %arg1 : i32
    %c0_i32 = arith.constant 0 : i32
    %c0_i32_0 = arith.constant 0 : i32
    return %1, %c0_i32 : i32, i32
  }
  func.func @transform_1(%arg0: i32, %arg1: i32) -> (i32, i32) {
    %c0_i32 = arith.constant 0 : i32
    %c0_i32_0 = arith.constant 0 : i32
    %c0_i32_1 = arith.constant 0 : i32
    return %c0_i32, %c0_i32_0 : i32, i32
  }
  func.func @transform_2(%arg0: i32, %arg1: i32) -> (i32, i32) {
    %c0_i32 = arith.constant 0 : i32
    %c0_i32_0 = arith.constant 0 : i32
    %c0_i32_1 = arith.constant 0 : i32
    return %c0_i32, %c0_i32_0 : i32, i32
  }
  func.func @transform_3(%arg0: i32, %arg1: i32) -> (i32, i32, i32) {
    %c0_i32 = arith.constant 0 : i32
    %c0_i32_0 = arith.constant 0 : i32
    %c0_i32_1 = arith.constant 0 : i32
    return %arg0, %c0_i32, %c0_i32_0 : i32, i32, i32
  }
}

</mosaic_0001>

<llo_original>
// kernel: tpu_custom_call.1
$region0: #{tpu_custom_call.1}
  #allocation0 [shape = 'u32[]', space=smem, size = 0x4, offset = 0x4, fixed_abs, tag = 'smem constant byte address 0x4 - core index']
  #allocation1 [shape = 'u32[144,128]{1,0:T(1,128)}', space=vmem, size = 0x12000, scoped, tag = 'internal scratch']
  %s0 = inlined_call_operand.hbm [shape: f32[32,128], index: 0, kind: input, shape index: {}]
  %s1 = inlined_call_operand.vmem [shape: f32[1,128], index: 1, kind: input, shape index: {}]
  %s2 = inlined_call_operand.vmem [shape: f32[1,128], index: 2, kind: input, shape index: {}]
  %s3 = inlined_call_operand.hbm [shape: f32[1,8,128], index: 3, kind: output, shape index: {}]
  %s4 = sld [smem:[#allocation0]]
  $region30: #{tpu_custom_call.1} parent=0
    _
  %s6 = ssub.s32 1, %s4
  %s7 = scalar_select 0, %s6, %s4
  $region1: #{tpu_custom_call.1} parent=0
    #allocation2 [shape = 'u8[16384]{0}', space=vmem, size = 0x4000, scoped, tag = 'input window, operand 0, single buffered']
    #allocation3 [shape = 's32[1]{0}', space=sflag, size = 0x4, scoped, tag = 'scoped memory for tpu_custom_call.1']
    #allocation4 [shape = 's32[1]{0}', space=sflag, size = 0x4, scoped, tag = 'scoped memory for tpu_custom_call.1']
    #allocation5 [shape = 'u8[4096]{0}', space=vmem, size = 0x1000, scoped, tag = 'output window, operand 0, single buffered']
    %8 = vsyncpa [#allocation3], 0
    %9 = vsyncpa [#allocation4], 0
    // Predicated region
    $region2: #{tpu_custom_call.1} parent=1 // pred_check
      _
    $region3: #{tpu_custom_call.1} parent=1 // pred_check_branch
      %11 = sbr.rel (0) target = $region5
    $region4: #{tpu_custom_call.1} parent=1 // pred_region
      %s12 = sadd.s32 0, 0
      %s13 = smul.u32 4, %s12
      %s15 = ssub.s32 512, 512
      %16 = vsyncadd [#allocation3], %s15
      %s17 = smul.addr %s13, 128
      %s18 = scalar_lea.hbm %s0, %s17
      %s19 = sshll.u32 [#allocation2], 4
      %s20 = int_to_ptr.vmem [resolvable:$true] %s19
      %25 = dma.hbm_to_vmem [thread:$0]  %s18, 512, %s20, [#allocation3], 128, 128, 8
    $region5: #{tpu_custom_call.1} parent=1 // pred_fallthru
      _
    // Predicated region
    $region6: #{tpu_custom_call.1} parent=1 // pred_check
      _
    $region7: #{tpu_custom_call.1} parent=1 // pred_check_branch
      %27 = sbr.rel (0) target = $region9
    $region8: #{tpu_custom_call.1} parent=1 // pred_region
      _
    $region9: #{tpu_custom_call.1} parent=1 // pred_fallthru
      _
    // Predicated region
    $region10: #{tpu_custom_call.1} parent=1 // pred_check
      _
    $region11: #{tpu_custom_call.1} parent=1 // pred_check_branch
      %29 = sbr.rel (0) target = $region13
    $region12: #{tpu_custom_call.1} parent=1 // pred_region
      _
    $region13: #{tpu_custom_call.1} parent=1 // pred_fallthru
      _
    // Predicated region
    $region14: #{tpu_custom_call.1} parent=1 // pred_check
      _
    $region15: #{tpu_custom_call.1} parent=1 // pred_check_branch
      %31 = sbr.rel (0) target = $region17
    $region16: #{tpu_custom_call.1} parent=1 // pred_region
      %32 = dma.done [#allocation3], 512
    $region17: #{tpu_custom_call.1} parent=1 // pred_fallthru
      _
    %s33 = sadd.s32 0, 0
    %s34 = smul.u32 4, %s33
    %p35 = scmp.eq.s32.totalorder 0, 0
    // Predicated region
    $region18: #{tpu_custom_call.1} parent=1 // pred_check
      %p36 = pneg %p35
    $region19: #{tpu_custom_call.1} parent=1 // pred_check_branch
      %38 = sbr.rel (%p36) target = $region21
    $region20: #{tpu_custom_call.1} parent=1 // pred_region
      %39 = vst [vmem:[#allocation5] sm:$0xff] 0.0
    $region21: #{tpu_custom_call.1} parent=1 // pred_fallthru
      _
    %v40 = vld [vmem:[#allocation2] sm:$0xff]
    %v41 = vld [vmem:[#allocation2 + $0x8] sm:$0xff]
    %v42 = vld [vmem:[#allocation2 + $0x10] sm:$0xff]
    %v43 = vld [vmem:[#allocation2 + $0x18] sm:$0xff]
    %v44 = vld [vmem:[%s1] sm:$0x1]
    %v45 = vld [vmem:[%s2] sm:$0x1]
    %v47 = vlaneseq
    %v48 = vshrl.u32 %v47, 7
    %v49 = vsub.s32 0, %v48
    %v50 = vrot.slane %v44, %v49
    %v52 = vmul.f32 %v50, %v40
    %v53 = vmul.f32 %v50, %v41
    %v54 = vmul.f32 %v50, %v42
    %v55 = vmul.f32 %v50, %v43
    %v57 = vlaneseq
    %v58 = vshrl.u32 %v57, 7
    %v59 = vsub.s32 0, %v58
    %v60 = vrot.slane %v45, %v59
    %v62 = vadd.f32 %v52, %v60
    %v63 = vadd.f32 %v53, %v60
    %v64 = vadd.f32 %v54, %v60
    %v65 = vadd.f32 %v55, %v60
    %v66 = vmul.f32 %v62, %v40
    %v67 = vmul.f32 %v63, %v41
    %v68 = vmul.f32 %v64, %v42
    %v69 = vmul.f32 %v65, %v43
    %v70 = vadd.f32 %v66, %v67
    %v71 = vadd.f32 %v70, %v68
    %v72 = vadd.f32 %v71, %v69
    %v73 = vld [vmem:[#allocation5] sm:$0xff]
    %v74 = vadd.f32 %v73, %v72
    %75 = vst [vmem:[#allocation5] sm:$0xff] %v74
    // Predicated region
    $region22: #{tpu_custom_call.1} parent=1 // pred_check
      _
    $region23: #{tpu_custom_call.1} parent=1 // pred_check_branch
      %77 = sbr.rel (0) target = $region25
    $region24: #{tpu_custom_call.1} parent=1 // pred_region
      %s79 = ssub.s32 128, 128
      %80 = vsyncadd [#allocation4], %s79
      %s82 = sshll.u32 [#allocation5], 4
      %s83 = int_to_ptr.vmem [resolvable:$true] %s82
      %85 = dma.vmem_to_hbm [thread:$0]  %s83, 128, %s3, [#allocation4]
    $region25: #{tpu_custom_call.1} parent=1 // pred_fallthru
      _
    // Predicated region
    $region26: #{tpu_custom_call.1} parent=1 // pred_check
      _
    $region27: #{tpu_custom_call.1} parent=1 // pred_check_branch
      %87 = sbr.rel (0) target = $region29
    $region28: #{tpu_custom_call.1} parent=1 // pred_region
      %88 = dma.done [#allocation4], 128
    $region29: #{tpu_custom_call.1} parent=1 // pred_fallthru
      _
    %89 = vsyncpa [#allocation3], 1
    %90 = vsyncpa [#allocation4], 1

</llo_original>
